<compile_context>
chip_gen: v6e
topology: v6e:2x2x1
jax: 0.10.0
libtpu: 0.0.40
codegen_flags: <defaults>
</compile_context>

<pallas_src>
import functools

import jax
import jax.numpy as jnp
from jax.experimental import pallas as pl
from jax.experimental.pallas import tpu as pltpu

EPS = 1e-5
EXPANSION = 4
LANE = 128                       # TPU lane width: keep channel dims 128-multiples


def _round_up(x, m):
    return (x + m - 1) // m * m


def _pad_axis_to(a, size, axis):
    if a.shape[axis] == size:
        return a
    widths = [(0, 0)] * a.ndim
    widths[axis] = (0, size - a.shape[axis])
    return jnp.pad(a, widths)


def _vmem_limit_bytes():
    """Generation-aware scoped-VMEM cap: ~3/4 of physical, at most 100 MiB.

    -> ~96 MiB on v5e/v6e (128 MiB physical), ~48 MiB on v7x (64 MiB physical).
    """
    cap = 128 * 1024 * 1024
    try:
        info = pltpu.get_tpu_info()
        cap = int(getattr(info, "vmem_capacity_bytes", cap))
    except Exception:
        pass
    return int(min(cap * 3 // 4, 100 * 1024 * 1024))


VMEM_LIMIT = _vmem_limit_bytes()


# --------------------------------------------------------------------------
# Pallas kernels
# --------------------------------------------------------------------------
def _mm_bn_kernel(x_ref, w_ref, s_ref, b_ref, o_ref, *, relu):
    """out = relu?( (x @ w) * scale + shift )   (BN folded into scale/shift)."""
    acc = jnp.dot(x_ref[...], w_ref[...], preferred_element_type=jnp.float32)
    out = acc * s_ref[...] + b_ref[...]
    if relu:
        out = jnp.maximum(out, 0.0)
    o_ref[...] = out.astype(o_ref.dtype)


def _mm_bn_add_relu_kernel(x_ref, w_ref, s_ref, b_ref, r_ref, o_ref):
    """out = relu( (x @ w) * scale + shift + residual )   (identity shortcut)."""
    acc = jnp.dot(x_ref[...], w_ref[...], preferred_element_type=jnp.float32)
    out = acc * s_ref[...] + b_ref[...] + r_ref[...].astype(jnp.float32)
    o_ref[...] = jnp.maximum(out, 0.0).astype(o_ref.dtype)


def _mm_bn_dual_relu_kernel(x_ref, w_ref, s_ref, b_ref,
                            xs_ref, ws_ref, ss_ref, bs_ref, o_ref):
    """conv3 + fused downsample shortcut:
       out = relu( (x @ w)*s + b + (xs @ ws)*ss + bs ), all in f32 accumulation."""
    acc = jnp.dot(x_ref[...], w_ref[...], preferred_element_type=jnp.float32)
    sc = jnp.dot(xs_ref[...], ws_ref[...], preferred_element_type=jnp.float32)
    out = acc * s_ref[...] + b_ref[...] + sc * ss_ref[...] + bs_ref[...]
    o_ref[...] = jnp.maximum(out, 0.0).astype(o_ref.dtype)


def _conv3x3_bn_relu_kernel(x_ref, w_ref, s_ref, b_ref, o_ref, *, stride, tho, wo):
    """3x3 conv (pad=1) + BN + ReLU for one (image, row-tile) grid point.

    x_ref: (stride*stride, Hq, Wq, Cin)  phase-decomposed padded input; its
           block index only depends on the image, so it stays VMEM-resident
           across the row-tile grid axis and the kernel slices its
           (halo-overlapping) row window with pl.ds.
    w_ref: (3, 3*Cin, Cout)  per ky row, the 3 kx taps stacked along K so each
           MXU dot contracts over 3*Cin (fills the 256-wide MXU on v6e/v7x).
    o_ref: (tho, wo, Cout)
    """
    cin = x_ref.shape[-1]
    cout = o_ref.shape[-1]
    row0 = pl.program_id(1) * tho
    acc = jnp.zeros((tho * wo, cout), jnp.float32)
    for dy in range(3):                      # unrolled: full LLO visibility
        taps = []
        for dx in range(3):
            phase = (dy % stride) * stride + (dx % stride)
            taps.append(x_ref[phase, pl.ds(row0 + dy // stride, tho),
                              pl.ds(dx // stride, wo), :])
        # NOTE: the (tho, wo, 3*cin) -> (tho*wo, 3*cin) collapse is layout-
        # preserving when wo is a multiple of 8 (true for the shapes used here).
        patch = jnp.concatenate(taps, axis=-1).reshape(tho * wo, 3 * cin)
        acc = acc + jnp.dot(patch, w_ref[dy], preferred_element_type=jnp.float32)
    out = acc * s_ref[...] + b_ref[...]
    o_ref[...] = jnp.maximum(out, 0.0).reshape(tho, wo, cout).astype(o_ref.dtype)


# --------------------------------------------------------------------------
# Pallas call wrappers
# --------------------------------------------------------------------------
def _choose_col_tile(cout, target):
    """Largest multiple of LANE dividing cout and <= target (cout itself if small)."""
    if cout <= target:
        return cout
    best = LANE
    t = LANE
    while t <= target:
        if cout % t == 0:
            best = t
        t += LANE
    return best


def fused_matmul_bn(x2d, w, scale, shift, *, relu, residual=None, shortcut=None,
                    block_m=512, block_n=512):
    """[M,K] @ [K,C] with folded-BN epilogue, tiled over (M, C).

    residual : optional [M, C] tensor added before a final ReLU (identity path).
    shortcut : optional (xs2d [M,Ks], ws [Ks,C], ss [C], bs [C]) — a second
               folded-BN 1x1 matmul fused into the same epilogue (downsample).
    """
    M, K = x2d.shape
    Cout = w.shape[1]
    tm = min(block_m, _round_up(M, 8))
    tn = _choose_col_tile(Cout, block_n)
    Mp = _round_up(M, tm)
    if Mp != M:
        x2d = _pad_axis_to(x2d, Mp, 0)
        if residual is not None:
            residual = _pad_axis_to(residual, Mp, 0)
        if shortcut is not None:
            shortcut = (_pad_axis_to(shortcut[0], Mp, 0),) + tuple(shortcut[1:])
    s2 = scale.reshape(1, Cout).astype(jnp.float32)
    b2 = shift.reshape(1, Cout).astype(jnp.float32)

    # TODO(synk): weight/scale/shift blocks have constant/slow-varying index
    # maps; single-buffering them (pipeline_mode=pl.Buffered(1)) would save a
    # little more VMEM once that knob is available on the top-level pipeline.
    in_specs = [
        pl.BlockSpec((tm, K), lambda i, j: (i, 0)),
        pl.BlockSpec((K, tn), lambda i, j: (0, j)),
        pl.BlockSpec((1, tn), lambda i, j: (0, j)),
        pl.BlockSpec((1, tn), lambda i, j: (0, j)),
    ]
    args = [x2d, w, s2, b2]
    flops = 2 * Mp * K * Cout
    if shortcut is not None:
        xs2d, ws, ss, bs = shortcut
        Ks = xs2d.shape[1]
        kernel = _mm_bn_dual_relu_kernel
        in_specs += [
            pl.BlockSpec((tm, Ks), lambda i, j: (i, 0)),
            pl.BlockSpec((Ks, tn), lambda i, j: (0, j)),
            pl.BlockSpec((1, tn), lambda i, j: (0, j)),
            pl.BlockSpec((1, tn), lambda i, j: (0, j)),
        ]
        args += [xs2d, ws, ss.reshape(1, Cout).astype(jnp.float32),
                 bs.reshape(1, Cout).astype(jnp.float32)]
        flops += 2 * Mp * Ks * Cout
    elif residual is not None:
        kernel = _mm_bn_add_relu_kernel
        in_specs.append(pl.BlockSpec((tm, tn), lambda i, j: (i, j)))
        args.append(residual)
    else:
        kernel = functools.partial(_mm_bn_kernel, relu=relu)

    bytes_accessed = sum(int(a.size) * a.dtype.itemsize for a in args)
    bytes_accessed += Mp * Cout * x2d.dtype.itemsize

    out = pl.pallas_call(
        kernel,
        out_shape=jax.ShapeDtypeStruct((Mp, Cout), x2d.dtype),
        grid=(Mp // tm, Cout // tn),
        in_specs=in_specs,
        out_specs=pl.BlockSpec((tm, tn), lambda i, j: (i, j)),
        compiler_params=pltpu.CompilerParams(
            dimension_semantics=("parallel", "parallel"),
            vmem_limit_bytes=VMEM_LIMIT),
        cost_estimate=pl.CostEstimate(flops=int(flops), transcendentals=0,
                                      bytes_accessed=int(bytes_accessed)),
    )(*args)
    return out[:M] if Mp != M else out


def _phase_decompose(yp, s):
    """(N, Hp, Wp, C) spatially padded -> (s*s, N, ceil(Hp/s), ceil(Wp/s), C).

    For stride s, phase (ph, pw) holds rows s*q+ph / cols s*q+pw; inside the
    kernel every 3x3 tap then becomes a *contiguous* slice of one phase.
    For s==1 this is just adding a leading size-1 axis (no data movement).
    """
    N, Hp, Wp, C = yp.shape
    Hq = -(-Hp // s)
    Wq = -(-Wp // s)
    yp = _pad_axis_to(_pad_axis_to(yp, Hq * s, 1), Wq * s, 2)
    yp = yp.reshape(N, Hq, s, Wq, s, C)
    return jnp.transpose(yp, (2, 4, 0, 1, 3, 5)).reshape(s * s, N, Hq, Wq, C)


def _choose_row_tile(ho, wo, cout, max_acc_bytes=256 * 1024):
    """Largest divisor of ho whose f32 accumulator (rows*wo, cout) fits ~vreg file."""
    best = 1
    for d in range(1, ho + 1):
        if ho % d == 0 and d * wo * cout * 4 <= max_acc_bytes:
            best = d
    return best


def fused_conv3x3_bn_relu(y, w3k, scale, shift, *, stride):
    """3x3 conv (pad=1, stride) + folded BN + ReLU.

    y   : (N, H, W, Cin) NHWC activations
    w3k : (3, 3*Cin, Cout)  ky-major weights with the 3 kx taps stacked along K.
    """
    N, H, W, Cin = y.shape
    Cout = w3k.shape[-1]
    Ho = (H - 1) // stride + 1
    Wo = (W - 1) // stride + 1
    yp = jnp.pad(y, ((0, 0), (1, 1), (1, 1), (0, 0)))
    xph = _phase_decompose(yp, stride)            # (s*s, N, Hq, Wq, Cin)
    _, _, Hq, Wq, _ = xph.shape
    s2 = scale.reshape(1, Cout).astype(jnp.float32)
    b2 = shift.reshape(1, Cout).astype(jnp.float32)

    tho = _choose_row_tile(Ho, Wo, Cout)          # register-sized accumulator
    kernel = functools.partial(_conv3x3_bn_relu_kernel,
                               stride=stride, tho=tho, wo=Wo)
    bytes_accessed = (int(xph.size) * xph.dtype.itemsize
                      + int(w3k.size) * w3k.dtype.itemsize
                      + N * Ho * Wo * Cout * y.dtype.itemsize + 2 * Cout * 4)
    return pl.pallas_call(
        kernel,
        out_shape=jax.ShapeDtypeStruct((N, Ho, Wo, Cout), y.dtype),
        grid=(N, Ho // tho),
        in_specs=[
            # Whole (phase-decomposed) image, resident across the row-tile axis.
            pl.BlockSpec((stride * stride, None, Hq, Wq, Cin),
                         lambda n, r: (0, n, 0, 0, 0)),
            pl.BlockSpec((3, 3 * Cin, Cout), lambda n, r: (0, 0, 0)),
            pl.BlockSpec((1, Cout), lambda n, r: (0, 0)),
            pl.BlockSpec((1, Cout), lambda n, r: (0, 0)),
        ],
        out_specs=pl.BlockSpec((None, tho, Wo, Cout), lambda n, r: (n, r, 0, 0)),
        compiler_params=pltpu.CompilerParams(
            dimension_semantics=("parallel", "parallel"),
            vmem_limit_bytes=VMEM_LIMIT),
        cost_estimate=pl.CostEstimate(flops=2 * N * Ho * Wo * 9 * Cin * Cout,
                                      transcendentals=0,
                                      bytes_accessed=int(bytes_accessed)),
    )(xph, w3k, s2, b2)


# --------------------------------------------------------------------------
# Glue (plain JAX): BN folding, padding, parameter init, forward
# --------------------------------------------------------------------------
def fold_bn(gamma, beta, mean, var):
    scale = gamma / jnp.sqrt(var + EPS)
    shift = beta - mean * scale
    return scale, shift


def init_params(key, in_planes, planes, stride):
    out_planes = EXPANSION * planes
    keys = jax.random.split(key, 16)

    def conv_w(k, shape):  # OIHW, He-style scale, deterministic
        fan_in = shape[1] * shape[2] * shape[3]
        return jax.random.normal(k, shape, jnp.float32) * (2.0 / fan_in) ** 0.5

    def bn_p(k, c):
        kg, kb, km, kv = jax.random.split(k, 4)
        gamma = 1.0 + 0.1 * jax.random.normal(kg, (c,), jnp.float32)
        beta = 0.1 * jax.random.normal(kb, (c,), jnp.float32)
        mean = 0.1 * jax.random.normal(km, (c,), jnp.float32)
        var = jnp.abs(jax.random.normal(kv, (c,), jnp.float32)) + 0.5
        return gamma, beta, mean, var

    p = {
        "w1": conv_w(keys[0], (planes, in_planes, 1, 1)),
        "bn1": bn_p(keys[1], planes),
        "w2": conv_w(keys[2], (planes, planes, 3, 3)),
        "bn2": bn_p(keys[3], planes),
        "w3": conv_w(keys[4], (out_planes, planes, 1, 1)),
        "bn3": bn_p(keys[5], out_planes),
    }
    if stride != 1 or in_planes != out_planes:
        p["ws"] = conv_w(keys[6], (out_planes, in_planes, 1, 1))
        p["bns"] = bn_p(keys[7], out_planes)
    return p


def bottleneck_forward(x_nchw, params, stride, *, compute_dtype=jnp.bfloat16,
                       block_m=512, block_n=512):
    """Pallas-backed forward; input/output NCHW like the PyTorch module."""
    cdt = compute_dtype
    x = jnp.transpose(x_nchw, (0, 2, 3, 1))            # NCHW -> NHWC
    N, H, W, Cin = x.shape
    planes = params["w1"].shape[0]
    out_planes = params["w3"].shape[0]
    cin_p = _round_up(Cin, LANE)                       # lane-dense channel pads
    pln_p = _round_up(planes, LANE)
    out_p = _round_up(out_planes, LANE)

    xp = _pad_axis_to(x, cin_p, 3).astype(cdt)

    # conv1 (1x1) + bn1 + relu
    s1, b1 = fold_bn(*params["bn1"])
    w1 = _pad_axis_to(_pad_axis_to(params["w1"][:, :, 0, 0].T, cin_p, 0), pln_p, 1)
    out = fused_matmul_bn(xp.reshape(-1, cin_p), w1.astype(cdt),
                          _pad_axis_to(s1, pln_p, 0), _pad_axis_to(b1, pln_p, 0),
                          relu=True, block_m=block_m, block_n=block_n)
    out = out.reshape(N, H, W, pln_p)

    # conv2 (3x3, stride, pad=1) + bn2 + relu — in-kernel 3-tap-stacked MXU
    # accumulation (K = 3*Cin per dot), row-tiled, no im2col through HBM.
    s2, b2 = fold_bn(*params["bn2"])
    w2 = jnp.transpose(params["w2"], (2, 3, 1, 0))        # (ky, kx, Cin, Cout)
    w2 = _pad_axis_to(_pad_axis_to(w2, pln_p, 2), pln_p, 3)
    w2 = w2.reshape(3, 3 * pln_p, pln_p)                  # ky-major, (kx,Cin) K axis
    out = fused_conv3x3_bn_relu(out, w2.astype(cdt),
                                _pad_axis_to(s2, pln_p, 0),
                                _pad_axis_to(b2, pln_p, 0), stride=stride)
    _, Ho, Wo, _ = out.shape

    # conv3 (1x1) + bn3 + shortcut + relu — fully fused in a single kernel.
    s3, b3 = fold_bn(*params["bn3"])
    w3 = _pad_axis_to(_pad_axis_to(params["w3"][:, :, 0, 0].T, pln_p, 0), out_p, 1)
    if "ws" in params:
        ss, bs = fold_bn(*params["bns"])
        ws = _pad_axis_to(_pad_axis_to(params["ws"][:, :, 0, 0].T, cin_p, 0), out_p, 1)
        # TODO(synk): fold this strided subsample into the shortcut operand's
        # BlockSpec (phase-split index_map) instead of an XLA slice.
        xs = xp[:, ::stride, ::stride, :].reshape(-1, cin_p)
        out = fused_matmul_bn(out.reshape(-1, pln_p), w3.astype(cdt),
                              _pad_axis_to(s3, out_p, 0), _pad_axis_to(b3, out_p, 0),
                              relu=True,
                              shortcut=(xs, ws.astype(cdt),
                                        _pad_axis_to(ss, out_p, 0),
                                        _pad_axis_to(bs, out_p, 0)),
                              block_m=block_m, block_n=block_n)
    else:
        # Identity path: stride == 1 and Cin == out_planes, so cin_p == out_p.
        shortcut = xp.reshape(-1, cin_p)
        out = fused_matmul_bn(out.reshape(-1, pln_p), w3.astype(cdt),
                              _pad_axis_to(s3, out_p, 0), _pad_axis_to(b3, out_p, 0),
                              relu=True, residual=shortcut,
                              block_m=block_m, block_n=block_n)
    out = out.reshape(N, Ho, Wo, out_p)[:, :, :, :out_planes]
    return jnp.transpose(out, (0, 3, 1, 2)).astype(x_nchw.dtype)


# --------------------------------------------------------------------------
# Pure-JAX reference (for correctness check)
# --------------------------------------------------------------------------
def ref_forward(x_nchw, params, stride):
    x = jnp.transpose(x_nchw, (0, 2, 3, 1))

    def bn(y, g, b, m, v):
        return (y - m) / jnp.sqrt(v + EPS) * g + b

    def conv(y, w_oihw, s, pad):
        w = jnp.transpose(w_oihw, (2, 3, 1, 0))  # HWIO
        return jax.lax.conv_general_dilated(
            y, w, (s, s), [(pad, pad), (pad, pad)],
            dimension_numbers=("NHWC", "HWIO", "NHWC"))

    out = jax.nn.relu(bn(conv(x, params["w1"], 1, 0), *params["bn1"]))
    out = jax.nn.relu(bn(conv(out, params["w2"], stride, 1), *params["bn2"]))
    out = bn(conv(out, params["w3"], 1, 0), *params["bn3"])
    if "ws" in params:
        sc = bn(conv(x, params["ws"], stride, 0), *params["bns"])
    else:
        sc = x
    out = jax.nn.relu(out + sc)
    return jnp.transpose(out, (0, 3, 1, 2))


# --------------------------------------------------------------------------
if __name__ == "__main__":
    key = jax.random.PRNGKey(0)
    k_x, k_p = jax.random.split(key)

    # (in_planes, planes, stride): downsample shortcut + identity shortcut cases.
    for in_planes, planes, stride in [(4, 4, 2), (16, 4, 1)]:
        x = jax.random.normal(k_x, (2, in_planes, 16, 16), jnp.float32)  # NCHW
        params = init_params(k_p, in_planes, planes, stride)

        ref = jax.block_until_ready(ref_forward(x, params, stride))

        # Strict numerics check: f32 compute path (same fusion/tiling structure).
        out_f32 = jax.block_until_ready(
            bottleneck_forward(x, params, stride, compute_dtype=jnp.float32))
        assert out_f32.shape == ref.shape
        assert jnp.allclose(out_f32, ref, rtol=1e-4, atol=1e-4), "f32 mismatch"

        # Fast path: bf16 MXU operands + bf16 intermediates, f32 accumulation.
        # Loose tolerance accounts for bf16 operand/activation rounding.
        out_bf16 = jax.block_until_ready(bottleneck_forward(x, params, stride))
        assert out_bf16.shape == ref.shape
        assert jnp.allclose(out_bf16, ref, rtol=1e-1, atol=1e-1), "bf16 mismatch"

    print("KERNEL_OK")
</pallas_src>

<mosaic_0001>
module attributes {stable_mosaic.version = 11 : i64} {
  func.func @_mm_bn_kernel(%arg0: i32, %arg1: i32, %arg2: memref<512x128xf32, #tpu.memory_space<vmem>>, %arg3: memref<128x128xf32, #tpu.memory_space<vmem>>, %arg4: memref<1x128xf32, #tpu.memory_space<vmem>>, %arg5: memref<1x128xf32, #tpu.memory_space<vmem>>, %arg6: memref<512x128xf32, #tpu.memory_space<vmem>>) attributes {dimension_semantics = [#tpu.dimension_semantics<parallel>, #tpu.dimension_semantics<parallel>], iteration_bounds = array<i64: 1, 1>, scalar_prefetch = 0 : i64, scratch_operands = 0 : i64, tpu.core_type = #tpu.core_type<tc>, window_params = [{transform_indices = @transform_0, window_bounds = array<i64: 512, 128>}, {transform_indices = @transform_1, window_bounds = array<i64: 128, 128>}, {transform_indices = @transform_2, window_bounds = array<i64: 1, 128>}, {transform_indices = @transform_3, window_bounds = array<i64: 1, 128>}, {transform_indices = @transform_4, window_bounds = array<i64: 512, 128>}]} {
    %c0 = arith.constant 0 : index
    %c0_0 = arith.constant 0 : index
    %0 = vector.load %arg2[%c0, %c0_0] : memref<512x128xf32, #tpu.memory_space<vmem>>, vector<512x128xf32>
    %c0_1 = arith.constant 0 : index
    %c0_2 = arith.constant 0 : index
    %1 = vector.load %arg3[%c0_1, %c0_2] : memref<128x128xf32, #tpu.memory_space<vmem>>, vector<128x128xf32>
    %cst = arith.constant dense<0.000000e+00> : vector<512x128xf32>
    %2 = tpu.matmul %0, %1, %cst {dimension_numbers = #tpu.dot_dimension_numbers<[1], [0], [0], [1], [0, 0, 1, 1], [], []>} : vector<512x128xf32>, vector<128x128xf32>, vector<512x128xf32> -> vector<512x128xf32>
    %c0_3 = arith.constant 0 : index
    %c0_4 = arith.constant 0 : index
    %3 = vector.load %arg4[%c0_3, %c0_4] : memref<1x128xf32, #tpu.memory_space<vmem>>, vector<1x128xf32>
    %4 = vector.broadcast %3 : vector<1x128xf32> to vector<512x128xf32>
    %5 = arith.mulf %2, %4 : vector<512x128xf32>
    %c0_5 = arith.constant 0 : index
    %c0_6 = arith.constant 0 : index
    %6 = vector.load %arg5[%c0_5, %c0_6] : memref<1x128xf32, #tpu.memory_space<vmem>>, vector<1x128xf32>
    %7 = vector.broadcast %6 : vector<1x128xf32> to vector<512x128xf32>
    %8 = arith.addf %5, %7 : vector<512x128xf32>
    %cst_7 = arith.constant 0.000000e+00 : f32
    %9 = vector.broadcast %cst_7 : f32 to vector<512x128xf32>
    %10 = arith.maximumf %8, %9 : vector<512x128xf32>
    %c0_8 = arith.constant 0 : index
    %c0_9 = arith.constant 0 : index
    %11 = vector.load %arg6[%c0_8, %c0_9] : memref<512x128xf32, #tpu.memory_space<vmem>>, vector<512x128xf32>
    tpu.vector_store %arg6[%c0_8, %c0_9], %10 {strides = array<i32>} : memref<512x128xf32, #tpu.memory_space<vmem>>, vector<512x128xf32>,
    return
  }
  func.func @transform_0(%arg0: i32, %arg1: i32) -> (i32, i32) {
    %c0_i32 = arith.constant 0 : i32
    %c0_i32_0 = arith.constant 0 : i32
    return %arg0, %c0_i32 : i32, i32
  }
  func.func @transform_1(%arg0: i32, %arg1: i32) -> (i32, i32) {
    %c0_i32 = arith.constant 0 : i32
    %c0_i32_0 = arith.constant 0 : i32
    return %c0_i32, %arg1 : i32, i32
  }
  func.func @transform_2(%arg0: i32, %arg1: i32) -> (i32, i32) {
    %c0_i32 = arith.constant 0 : i32
    %c0_i32_0 = arith.constant 0 : i32
    return %c0_i32, %arg1 : i32, i32
  }
  func.func @transform_3(%arg0: i32, %arg1: i32) -> (i32, i32) {
    %c0_i32 = arith.constant 0 : i32
    %c0_i32_0 = arith.constant 0 : i32
    return %c0_i32, %arg1 : i32, i32
  }
  func.func @transform_4(%arg0: i32, %arg1: i32) -> (i32, i32) {
    %c0_i32 = arith.constant 0 : i32
    return %arg0, %arg1 : i32, i32
  }
}

</mosaic_0001>

<llo_original>
// kernel: tpu_custom_call.1
$region0: #{tpu_custom_call.1}
  #allocation0 [shape = 'u32[]', space=smem, size = 0x4, offset = 0x4, fixed_abs, tag = 'smem constant byte address 0x4 - core index']
  #allocation1 [shape = 'u32[144,128]{1,0:T(1,128)}', space=vmem, size = 0x12000, scoped, tag = 'internal scratch']
  %s0 = inlined_call_operand.hbm [shape: f32[512,128], index: 0, kind: input, shape index: {}]
  %s1 = inlined_call_operand.hbm [shape: f32[128,128], index: 1, kind: input, shape index: {}]
  %s2 = inlined_call_operand.vmem [shape: f32[1,128], index: 2, kind: input, shape index: {}]
  %s3 = inlined_call_operand.vmem [shape: f32[1,128], index: 3, kind: input, shape index: {}]
  %s4 = inlined_call_operand.hbm [shape: f32[512,128], index: 4, kind: output, shape index: {}]
  %s5 = sld [smem:[#allocation0]]
  $region34: #{tpu_custom_call.1} parent=0
    _
  %s7 = ssub.s32 1, %s5
  %s8 = scalar_select 0, %s7, %s5
  $region1: #{tpu_custom_call.1} parent=0
    #allocation2 [shape = 'u8[262144]{0}', space=vmem, size = 0x40000, scoped, tag = 'input window, operand 0, single buffered']
    #allocation3 [shape = 's32[1]{0}', space=sflag, size = 0x4, scoped, tag = 'scoped memory for tpu_custom_call.1']
    #allocation4 [shape = 's32[1]{0}', space=sflag, size = 0x4, scoped, tag = 'scoped memory for tpu_custom_call.1']
    #allocation5 [shape = 'u8[65536]{0}', space=vmem, size = 0x10000, scoped, tag = 'input window, operand 1, single buffered']
    #allocation6 [shape = 's32[1]{0}', space=sflag, size = 0x4, scoped, tag = 'scoped memory for tpu_custom_call.1']
    #allocation7 [shape = 'u8[262144]{0}', space=vmem, size = 0x40000, scoped, tag = 'output window, operand 0, single buffered']
    %9 = vsyncpa [#allocation3], 0
    %10 = vsyncpa [#allocation6], 0
    %11 = vsyncpa [#allocation4], 0
    // Predicated region
    $region2: #{tpu_custom_call.1} parent=1 // pred_check
      _
    $region3: #{tpu_custom_call.1} parent=1 // pred_check_branch
      %13 = sbr.rel (0) target = $region5
    $region4: #{tpu_custom_call.1} parent=1 // pred_region
      %s15 = ssub.s32 8192, 8192
      %16 = vsyncadd [#allocation3], %s15
      %s17 = sshll.u32 [#allocation2], 4
      %s18 = int_to_ptr.vmem [resolvable:$true] %s17
      %23 = dma.hbm_to_vmem [thread:$0]  %s0, 8192, %s18, [#allocation3], 128, 128, 8
    $region5: #{tpu_custom_call.1} parent=1 // pred_fallthru
      _
    // Predicated region
    $region6: #{tpu_custom_call.1} parent=1 // pred_check
      _
    $region7: #{tpu_custom_call.1} parent=1 // pred_check_branch
      %25 = sbr.rel (0) target = $region9
    $region8: #{tpu_custom_call.1} parent=1 // pred_region
      %s27 = ssub.s32 2048, 2048
      %28 = vsyncadd [#allocation6], %s27
      %s29 = sshll.u32 [#allocation5], 4
      %s30 = int_to_ptr.vmem [resolvable:$true] %s29
      %35 = dma.hbm_to_vmem [thread:$0]  %s1, 2048, %s30, [#allocation6], 128, 128, 8
    $region9: #{tpu_custom_call.1} parent=1 // pred_fallthru
      _
    // Predicated region
    $region10: #{tpu_custom_call.1} parent=1 // pred_check
      _
    $region11: #{tpu_custom_call.1} parent=1 // pred_check_branch
      %37 = sbr.rel (0) target = $region13
    $region12: #{tpu_custom_call.1} parent=1 // pred_region
      _
    $region13: #{tpu_custom_call.1} parent=1 // pred_fallthru
      _
    // Predicated region
    $region14: #{tpu_custom_call.1} parent=1 // pred_check
      _
    $region15: #{tpu_custom_call.1} parent=1 // pred_check_branch
      %39 = sbr.rel (0) target = $region17
    $region16: #{tpu_custom_call.1} parent=1 // pred_region
      _
    $region17: #{tpu_custom_call.1} parent=1 // pred_fallthru
      _
    // Predicated region
    $region18: #{tpu_custom_call.1} parent=1 // pred_check
      _
    $region19: #{tpu_custom_call.1} parent=1 // pred_check_branch
      %41 = sbr.rel (0) target = $region21
    $region20: #{tpu_custom_call.1} parent=1 // pred_region
      %42 = dma.done [#allocation3], 8192
    $region21: #{tpu_custom_call.1} parent=1 // pred_fallthru
      _
    // Predicated region
    $region22: #{tpu_custom_call.1} parent=1 // pred_check
      _
    $region23: #{tpu_custom_call.1} parent=1 // pred_check_branch
      %44 = sbr.rel (0) target = $region25
    $region24: #{tpu_custom_call.1} parent=1 // pred_region
      %45 = dma.done [#allocation6], 2048
    $region25: #{tpu_custom_call.1} parent=1 // pred_fallthru
      _
    %v46 = vld [vmem:[#allocation2] sm:$0xff]
    %v47 = vld [vmem:[#allocation2 + $0x8] sm:$0xff]
    %v48 = vld [vmem:[#allocation2 + $0x10] sm:$0xff]
    %v49 = vld [vmem:[#allocation2 + $0x18] sm:$0xff]
    %v50 = vld [vmem:[#allocation2 + $0x20] sm:$0xff]
    %v51 = vld [vmem:[#allocation2 + $0x28] sm:$0xff]
    %v52 = vld [vmem:[#allocation2 + $0x30] sm:$0xff]
    %v53 = vld [vmem:[#allocation2 + $0x38] sm:$0xff]
    %v54 = vld [vmem:[#allocation2 + $0x40] sm:$0xff]
    %v55 = vld [vmem:[#allocation2 + $0x48] sm:$0xff]
    %v56 = vld [vmem:[#allocation2 + $0x50] sm:$0xff]
    %v57 = vld [vmem:[#allocation2 + $0x58] sm:$0xff]
    %v58 = vld [vmem:[#allocation2 + $0x60] sm:$0xff]
    %v59 = vld [vmem:[#allocation2 + $0x68] sm:$0xff]
    %v60 = vld [vmem:[#allocation2 + $0x70] sm:$0xff]
    %v61 = vld [vmem:[#allocation2 + $0x78] sm:$0xff]
    %v62 = vld [vmem:[#allocation2 + $0x80] sm:$0xff]
    %v63 = vld [vmem:[#allocation2 + $0x88] sm:$0xff]
    %v64 = vld [vmem:[#allocation2 + $0x90] sm:$0xff]
    %v65 = vld [vmem:[#allocation2 + $0x98] sm:$0xff]
    %v66 = vld [vmem:[#allocation2 + $0xa0] sm:$0xff]
    %v67 = vld [vmem:[#allocation2 + $0xa8] sm:$0xff]
    %v68 = vld [vmem:[#allocation2 + $0xb0] sm:$0xff]
    %v69 = vld [vmem:[#allocation2 + $0xb8] sm:$0xff]
    %v70 = vld [vmem:[#allocation2 + $0xc0] sm:$0xff]
    %v71 = vld [vmem:[#allocation2 + $0xc8] sm:$0xff]
    %v72 = vld [vmem:[#allocation2 + $0xd0] sm:$0xff]
    %v73 = vld [vmem:[#allocation2 + $0xd8] sm:$0xff]
    %v74 = vld [vmem:[#allocation2 + $0xe0] sm:$0xff]
    %v75 = vld [vmem:[#allocation2 + $0xe8] sm:$0xff]
    %v76 = vld [vmem:[#allocation2 + $0xf0] sm:$0xff]
    %v77 = vld [vmem:[#allocation2 + $0xf8] sm:$0xff]
    %v78 = vld [vmem:[#allocation2 + $0x100] sm:$0xff]
    %v79 = vld [vmem:[#allocation2 + $0x108] sm:$0xff]
    %v80 = vld [vmem:[#allocation2 + $0x110] sm:$0xff]
    %v81 = vld [vmem:[#allocation2 + $0x118] sm:$0xff]
    %v82 = vld [vmem:[#allocation2 + $0x120] sm:$0xff]
    %v83 = vld [vmem:[#allocation2 + $0x128] sm:$0xff]
    %v84 = vld [vmem:[#allocation2 + $0x130] sm:$0xff]
    %v85 = vld [vmem:[#allocation2 + $0x138] sm:$0xff]
    %v86 = vld [vmem:[#allocation2 + $0x140] sm:$0xff]
    %v87 = vld [vmem:[#allocation2 + $0x148] sm:$0xff]
    %v88 = vld [vmem:[#allocation2 + $0x150] sm:$0xff]
    %v89 = vld [vmem:[#allocation2 + $0x158] sm:$0xff]
    %v90 = vld [vmem:[#allocation2 + $0x160] sm:$0xff]
    %v91 = vld [vmem:[#allocation2 + $0x168] sm:$0xff]
    %v92 = vld [vmem:[#allocation2 + $0x170] sm:$0xff]
    %v93 = vld [vmem:[#allocation2 + $0x178] sm:$0xff]
    %v94 = vld [vmem:[#allocation2 + $0x180] sm:$0xff]
    %v95 = vld [vmem:[#allocation2 + $0x188] sm:$0xff]
    %v96 = vld [vmem:[#allocation2 + $0x190] sm:$0xff]
    %v97 = vld [vmem:[#allocation2 + $0x198] sm:$0xff]
    %v98 = vld [vmem:[#allocation2 + $0x1a0] sm:$0xff]
    %v99 = vld [vmem:[#allocation2 + $0x1a8] sm:$0xff]
    %v100 = vld [vmem:[#allocation2 + $0x1b0] sm:$0xff]
    %v101 = vld [vmem:[#allocation2 + $0x1b8] sm:$0xff]
    %v102 = vld [vmem:[#allocation2 + $0x1c0] sm:$0xff]
    %v103 = vld [vmem:[#allocation2 + $0x1c8] sm:$0xff]
    %v104 = vld [vmem:[#allocation2 + $0x1d0] sm:$0xff]
    %v105 = vld [vmem:[#allocation2 + $0x1d8] sm:$0xff]
    %v106 = vld [vmem:[#allocation2 + $0x1e0] sm:$0xff]
    %v107 = vld [vmem:[#allocation2 + $0x1e8] sm:$0xff]
    %v108 = vld [vmem:[#allocation2 + $0x1f0] sm:$0xff]
    %v109 = vld [vmem:[#allocation2 + $0x1f8] sm:$0xff]
    %v110 = vld [vmem:[#allocation5] sm:$0xff]
    %v111 = vld [vmem:[#allocation5 + $0x8] sm:$0xff]
    %v112 = vld [vmem:[#allocation5 + $0x10] sm:$0xff]
    %v113 = vld [vmem:[#allocation5 + $0x18] sm:$0xff]
    %v114 = vld [vmem:[#allocation5 + $0x20] sm:$0xff]
    %v115 = vld [vmem:[#allocation5 + $0x28] sm:$0xff]
    %v116 = vld [vmem:[#allocation5 + $0x30] sm:$0xff]
    %v117 = vld [vmem:[#allocation5 + $0x38] sm:$0xff]
    %v118 = vld [vmem:[#allocation5 + $0x40] sm:$0xff]
    %v119 = vld [vmem:[#allocation5 + $0x48] sm:$0xff]
    %v120 = vld [vmem:[#allocation5 + $0x50] sm:$0xff]
    %v121 = vld [vmem:[#allocation5 + $0x58] sm:$0xff]
    %v122 = vld [vmem:[#allocation5 + $0x60] sm:$0xff]
    %v123 = vld [vmem:[#allocation5 + $0x68] sm:$0xff]
    %v124 = vld [vmem:[#allocation5 + $0x70] sm:$0xff]
    %v125 = vld [vmem:[#allocation5 + $0x78] sm:$0xff]
    %126 = vmatprep.subr.mxu0 0.0
    %127 = vmatpush1.msra.mxu0 %v125
    %128 = vmatprep.subr.mxu0 0.0
    %129 = vmatpush1.msra.mxu0 %v124
    %130 = vmatprep.subr.mxu0 0.0
    %131 = vmatpush1.msra.mxu0 %v123
    %132 = vmatprep.subr.mxu0 0.0
    %133 = vmatpush1.msra.mxu0 %v122
    %134 = vmatprep.subr.mxu0 0.0
    %135 = vmatpush1.msra.mxu0 %v121
    %136 = vmatprep.subr.mxu0 0.0
    %137 = vmatpush1.msra.mxu0 %v120
    %138 = vmatprep.subr.mxu0 0.0
    %139 = vmatpush1.msra.mxu0 %v119
    %140 = vmatprep.subr.mxu0 0.0
    %141 = vmatpush1.msra.mxu0 %v118
    %142 = vmatprep.subr.mxu0 0.0
    %143 = vmatpush1.msra.mxu0 %v117
    %144 = vmatprep.subr.mxu0 0.0
    %145 = vmatpush1.msra.mxu0 %v116
    %146 = vmatprep.subr.mxu0 0.0
    %147 = vmatpush1.msra.mxu0 %v115
    %148 = vmatprep.subr.mxu0 0.0
    %149 = vmatpush1.msra.mxu0 %v114
    %150 = vmatprep.subr.mxu0 0.0
    %151 = vmatpush1.msra.mxu0 %v113
    %152 = vmatprep.subr.mxu0 0.0
    %153 = vmatpush1.msra.mxu0 %v112
    %154 = vmatprep.subr.mxu0 0.0
    %155 = vmatpush1.msra.mxu0 %v111
    %156 = vmatprep.subr.mxu0 0.0
    %157 = vmatpush1.msra.mxu0 %v110
    %158 = vmatprep.subr.mxu0 0.0
    %159 = vmatpush2.msra.mxu0 0.0
    %160 = vmatprep.subr.mxu0 0.0
    %161 = vmatpush2.msra.mxu0 0.0
    %162 = vmatprep.subr.mxu0 0.0
    %163 = vmatpush2.msra.mxu0 0.0
    %164 = vmatprep.subr.mxu0 0.0
    %165 = vmatpush2.msra.mxu0 0.0
    %166 = vmatprep.subr.mxu0 0.0
    %167 = vmatpush2.msra.mxu0 0.0
    %168 = vmatprep.subr.mxu0 0.0
    %169 = vmatpush2.msra.mxu0 0.0
    %170 = vmatprep.subr.mxu0 0.0
    %171 = vmatpush2.msra.mxu0 0.0
    %172 = vmatprep.subr.mxu0 0.0
    %173 = vmatpush2.msra.mxu0 0.0
    %174 = vmatprep.subr.mxu0 0.0
    %175 = vmatpush2.msra.mxu0 0.0
    %176 = vmatprep.subr.mxu0 0.0
    %177 = vmatpush2.msra.mxu0 0.0
    %178 = vmatprep.subr.mxu0 0.0
    %179 = vmatpush2.msra.mxu0 0.0
    %180 = vmatprep.subr.mxu0 0.0
    %181 = vmatpush2.msra.mxu0 0.0
    %182 = vmatprep.subr.mxu0 0.0
    %183 = vmatpush2.msra.mxu0 0.0
    %184 = vmatprep.subr.mxu0 0.0
    %185 = vmatpush2.msra.mxu0 0.0
    %186 = vmatprep.subr.mxu0 0.0
    %187 = vmatpush2.msra.mxu0 0.0
    %188 = vmatprep.subr.mxu0 0.0
    %189 = vmatpush2.msra.mxu0 0.0
    %190 = vmatprep.mubr.f32.mxu0 0.0
    %191 = vmatmul.mubr.f32.gmra.mxu0 %v46
    %v192 = vpop.f32.mrf.mxu0
    %v193 = vadd.f32 0.0, %v192
    %v194 = vpop.f32.mrf.mxu0
    %195 = vmatprep.mubr.f32.mxu0 0.0
    %196 = vmatmul.mubr.f32.gmra.mxu0 %v47
    %v197 = vpop.f32.mrf.mxu0
    %v198 = vadd.f32 0.0, %v197
    %v199 = vpop.f32.mrf.mxu0
    %200 = vmatprep.mubr.f32.mxu0 0.0
    %201 = vmatmul.mubr.f32.gmra.mxu0 %v48
    %v202 = vpop.f32.mrf.mxu0
    %v203 = vadd.f32 0.0, %v202
    %v204 = vpop.f32.mrf.mxu0
    %205 = vmatprep.mubr.f32.mxu0 0.0
    %206 = vmatmul.mubr.f32.gmra.mxu0 %v49
    %v207 = vpop.f32.mrf.mxu0
    %v208 = vadd.f32 0.0, %v207
    %v209 = vpop.f32.mrf.mxu0
    %210 = vmatprep.mubr.f32.mxu0 0.0
    %211 = vmatmul.mubr.f32.gmra.mxu0 %v50
    %v212 = vpop.f32.mrf.mxu0
    %v213 = vadd.f32 0.0, %v212
    %v214 = vpop.f32.mrf.mxu0
    %215 = vmatprep.mubr.f32.mxu0 0.0
    %216 = vmatmul.mubr.f32.gmra.mxu0 %v51
    %v217 = vpop.f32.mrf.mxu0
    %v218 = vadd.f32 0.0, %v217
    %v219 = vpop.f32.mrf.mxu0
    %220 = vmatprep.mubr.f32.mxu0 0.0
    %221 = vmatmul.mubr.f32.gmra.mxu0 %v52
    %v222 = vpop.f32.mrf.mxu0
    %v223 = vadd.f32 0.0, %v222
    %v224 = vpop.f32.mrf.mxu0
    %225 = vmatprep.mubr.f32.mxu0 0.0
    %226 = vmatmul.mubr.f32.gmra.mxu0 %v53
    %v227 = vpop.f32.mrf.mxu0
    %v228 = vadd.f32 0.0, %v227
    %v229 = vpop.f32.mrf.mxu0
    %230 = vmatprep.mubr.f32.mxu0 0.0
    %231 = vmatmul.mubr.f32.gmra.mxu0 %v54
    %v232 = vpop.f32.mrf.mxu0
    %v233 = vadd.f32 0.0, %v232
    %v234 = vpop.f32.mrf.mxu0
    %235 = vmatprep.mubr.f32.mxu0 0.0
    %236 = vmatmul.mubr.f32.gmra.mxu0 %v55
    %v237 = vpop.f32.mrf.mxu0
    %v238 = vadd.f32 0.0, %v237
    %v239 = vpop.f32.mrf.mxu0
    %240 = vmatprep.mubr.f32.mxu0 0.0
    %241 = vmatmul.mubr.f32.gmra.mxu0 %v56
    %v242 = vpop.f32.mrf.mxu0
    %v243 = vadd.f32 0.0, %v242
    %v244 = vpop.f32.mrf.mxu0
    %245 = vmatprep.mubr.f32.mxu0 0.0
    %246 = vmatmul.mubr.f32.gmra.mxu0 %v57
    %v247 = vpop.f32.mrf.mxu0
    %v248 = vadd.f32 0.0, %v247
    %v249 = vpop.f32.mrf.mxu0
    %250 = vmatprep.mubr.f32.mxu0 0.0
    %251 = vmatmul.mubr.f32.gmra.mxu0 %v58
    %v252 = vpop.f32.mrf.mxu0
    %v253 = vadd.f32 0.0, %v252
    %v254 = vpop.f32.mrf.mxu0
    %255 = vmatprep.mubr.f32.mxu0 0.0
    %256 = vmatmul.mubr.f32.gmra.mxu0 %v59
    %v257 = vpop.f32.mrf.mxu0
    %v258 = vadd.f32 0.0, %v257
    %v259 = vpop.f32.mrf.mxu0
    %260 = vmatprep.mubr.f32.mxu0 0.0
    %261 = vmatmul.mubr.f32.gmra.mxu0 %v60
    %v262 = vpop.f32.mrf.mxu0
    %v263 = vadd.f32 0.0, %v262
    %v264 = vpop.f32.mrf.mxu0
    %265 = vmatprep.mubr.f32.mxu0 0.0
    %266 = vmatmul.mubr.f32.gmra.mxu0 %v61
    %v267 = vpop.f32.mrf.mxu0
    %v268 = vadd.f32 0.0, %v267
    %v269 = vpop.f32.mrf.mxu0
    %270 = vmatprep.mubr.f32.mxu0 0.0
    %271 = vmatmul.mubr.f32.gmra.mxu0 %v62
    %v272 = vpop.f32.mrf.mxu0
    %v273 = vadd.f32 0.0, %v272
    %v274 = vpop.f32.mrf.mxu0
    %275 = vmatprep.mubr.f32.mxu0 0.0
    %276 = vmatmul.mubr.f32.gmra.mxu0 %v63
    %v277 = vpop.f32.mrf.mxu0
    %v278 = vadd.f32 0.0, %v277
    %v279 = vpop.f32.mrf.mxu0
    %280 = vmatprep.mubr.f32.mxu0 0.0
    %281 = vmatmul.mubr.f32.gmra.mxu0 %v64
    %v282 = vpop.f32.mrf.mxu0
    %v283 = vadd.f32 0.0, %v282
    %v284 = vpop.f32.mrf.mxu0
    %285 = vmatprep.mubr.f32.mxu0 0.0
    %286 = vmatmul.mubr.f32.gmra.mxu0 %v65
    %v287 = vpop.f32.mrf.mxu0
    %v288 = vadd.f32 0.0, %v287
    %v289 = vpop.f32.mrf.mxu0
    %290 = vmatprep.mubr.f32.mxu0 0.0
    %291 = vmatmul.mubr.f32.gmra.mxu0 %v66
    %v292 = vpop.f32.mrf.mxu0
    %v293 = vadd.f32 0.0, %v292
    %v294 = vpop.f32.mrf.mxu0
    %295 = vmatprep.mubr.f32.mxu0 0.0
    %296 = vmatmul.mubr.f32.gmra.mxu0 %v67
    %v297 = vpop.f32.mrf.mxu0
    %v298 = vadd.f32 0.0, %v297
    %v299 = vpop.f32.mrf.mxu0
    %300 = vmatprep.mubr.f32.mxu0 0.0
    %301 = vmatmul.mubr.f32.gmra.mxu0 %v68
    %v302 = vpop.f32.mrf.mxu0
    %v303 = vadd.f32 0.0, %v302
    %v304 = vpop.f32.mrf.mxu0
    %305 = vmatprep.mubr.f32.mxu0 0.0
    %306 = vmatmul.mubr.f32.gmra.mxu0 %v69
    %v307 = vpop.f32.mrf.mxu0
    %v308 = vadd.f32 0.0, %v307
    %v309 = vpop.f32.mrf.mxu0
    %310 = vmatprep.mubr.f32.mxu0 0.0
    %311 = vmatmul.mubr.f32.gmra.mxu0 %v70
    %v312 = vpop.f32.mrf.mxu0
    %v313 = vadd.f32 0.0, %v312
    %v314 = vpop.f32.mrf.mxu0
    %315 = vmatprep.mubr.f32.mxu0 0.0
    %316 = vmatmul.mubr.f32.gmra.mxu0 %v71
    %v317 = vpop.f32.mrf.mxu0
    %v318 = vadd.f32 0.0, %v317
    %v319 = vpop.f32.mrf.mxu0
    %320 = vmatprep.mubr.f32.mxu0 0.0
    %321 = vmatmul.mubr.f32.gmra.mxu0 %v72
    %v322 = vpop.f32.mrf.mxu0
    %v323 = vadd.f32 0.0, %v322
    %v324 = vpop.f32.mrf.mxu0
    %325 = vmatprep.mubr.f32.mxu0 0.0
    %326 = vmatmul.mubr.f32.gmra.mxu0 %v73
    %v327 = vpop.f32.mrf.mxu0
    %v328 = vadd.f32 0.0, %v327
    %v329 = vpop.f32.mrf.mxu0
    %330 = vmatprep.mubr.f32.mxu0 0.0
    %331 = vmatmul.mubr.f32.gmra.mxu0 %v74
    %v332 = vpop.f32.mrf.mxu0
    %v333 = vadd.f32 0.0, %v332
    %v334 = vpop.f32.mrf.mxu0
    %335 = vmatprep.mubr.f32.mxu0 0.0
    %336 = vmatmul.mubr.f32.gmra.mxu0 %v75
    %v337 = vpop.f32.mrf.mxu0
    %v338 = vadd.f32 0.0, %v337
    %v339 = vpop.f32.mrf.mxu0
    %340 = vmatprep.mubr.f32.mxu0 0.0
    %341 = vmatmul.mubr.f32.gmra.mxu0 %v76
    %v342 = vpop.f32.mrf.mxu0
    %v343 = vadd.f32 0.0, %v342
    %v344 = vpop.f32.mrf.mxu0
    %345 = vmatprep.mubr.f32.mxu0 0.0
    %346 = vmatmul.mubr.f32.gmra.mxu0 %v77
    %v347 = vpop.f32.mrf.mxu0
    %v348 = vadd.f32 0.0, %v347
    %v349 = vpop.f32.mrf.mxu0
    %350 = vmatprep.mubr.f32.mxu0 0.0
    %351 = vmatmul.mubr.f32.gmra.mxu0 %v78
    %v352 = vpop.f32.mrf.mxu0
    %v353 = vadd.f32 0.0, %v352
    %v354 = vpop.f32.mrf.mxu0
    %355 = vmatprep.mubr.f32.mxu0 0.0
    %356 = vmatmul.mubr.f32.gmra.mxu0 %v79
    %v357 = vpop.f32.mrf.mxu0
    %v358 = vadd.f32 0.0, %v357
    %v359 = vpop.f32.mrf.mxu0
    %360 = vmatprep.mubr.f32.mxu0 0.0
    %361 = vmatmul.mubr.f32.gmra.mxu0 %v80
    %v362 = vpop.f32.mrf.mxu0
    %v363 = vadd.f32 0.0, %v362
    %v364 = vpop.f32.mrf.mxu0
    %365 = vmatprep.mubr.f32.mxu0 0.0
    %366 = vmatmul.mubr.f32.gmra.mxu0 %v81
    %v367 = vpop.f32.mrf.mxu0
    %v368 = vadd.f32 0.0, %v367
    %v369 = vpop.f32.mrf.mxu0
    %370 = vmatprep.mubr.f32.mxu0 0.0
    %371 = vmatmul.mubr.f32.gmra.mxu0 %v82
    %v372 = vpop.f32.mrf.mxu0
    %v373 = vadd.f32 0.0, %v372
    %v374 = vpop.f32.mrf.mxu0
    %375 = vmatprep.mubr.f32.mxu0 0.0
    %376 = vmatmul.mubr.f32.gmra.mxu0 %v83
    %v377 = vpop.f32.mrf.mxu0
    %v378 = vadd.f32 0.0, %v377
    %v379 = vpop.f32.mrf.mxu0
    %380 = vmatprep.mubr.f32.mxu0 0.0
    %381 = vmatmul.mubr.f32.gmra.mxu0 %v84
    %v382 = vpop.f32.mrf.mxu0
    %v383 = vadd.f32 0.0, %v382
    %v384 = vpop.f32.mrf.mxu0
    %385 = vmatprep.mubr.f32.mxu0 0.0
    %386 = vmatmul.mubr.f32.gmra.mxu0 %v85
    %v387 = vpop.f32.mrf.mxu0
    %v388 = vadd.f32 0.0, %v387
    %v389 = vpop.f32.mrf.mxu0
    %390 = vmatprep.mubr.f32.mxu0 0.0
    %391 = vmatmul.mubr.f32.gmra.mxu0 %v86
    %v392 = vpop.f32.mrf.mxu0
    %v393 = vadd.f32 0.0, %v392
    %v394 = vpop.f32.mrf.mxu0
    %395 = vmatprep.mubr.f32.mxu0 0.0
    %396 = vmatmul.mubr.f32.gmra.mxu0 %v87
    %v397 = vpop.f32.mrf.mxu0
    %v398 = vadd.f32 0.0, %v397
    %v399 = vpop.f32.mrf.mxu0
    %400 = vmatprep.mubr.f32.mxu0 0.0
    %401 = vmatmul.mubr.f32.gmra.mxu0 %v88
    %v402 = vpop.f32.mrf.mxu0
    %v403 = vadd.f32 0.0, %v402
    %v404 = vpop.f32.mrf.mxu0
    %405 = vmatprep.mubr.f32.mxu0 0.0
    %406 = vmatmul.mubr.f32.gmra.mxu0 %v89
    %v407 = vpop.f32.mrf.mxu0
    %v408 = vadd.f32 0.0, %v407
    %v409 = vpop.f32.mrf.mxu0
    %410 = vmatprep.mubr.f32.mxu0 0.0
    %411 = vmatmul.mubr.f32.gmra.mxu0 %v90
    %v412 = vpop.f32.mrf.mxu0
    %v413 = vadd.f32 0.0, %v412
    %v414 = vpop.f32.mrf.mxu0
    %415 = vmatprep.mubr.f32.mxu0 0.0
    %416 = vmatmul.mubr.f32.gmra.mxu0 %v91
    %v417 = vpop.f32.mrf.mxu0
    %v418 = vadd.f32 0.0, %v417
    %v419 = vpop.f32.mrf.mxu0
    %420 = vmatprep.mubr.f32.mxu0 0.0
    %421 = vmatmul.mubr.f32.gmra.mxu0 %v92
    %v422 = vpop.f32.mrf.mxu0
    %v423 = vadd.f32 0.0, %v422
    %v424 = vpop.f32.mrf.mxu0
    %425 = vmatprep.mubr.f32.mxu0 0.0
    %426 = vmatmul.mubr.f32.gmra.mxu0 %v93
    %v427 = vpop.f32.mrf.mxu0
    %v428 = vadd.f32 0.0, %v427
    %v429 = vpop.f32.mrf.mxu0
    %430 = vmatprep.mubr.f32.mxu0 0.0
    %431 = vmatmul.mubr.f32.gmra.mxu0 %v94
    %v432 = vpop.f32.mrf.mxu0
    %v433 = vadd.f32 0.0, %v432
    %v434 = vpop.f32.mrf.mxu0
    %435 = vmatprep.mubr.f32.mxu0 0.0
    %436 = vmatmul.mubr.f32.gmra.mxu0 %v95
    %v437 = vpop.f32.mrf.mxu0
    %v438 = vadd.f32 0.0, %v437
    %v439 = vpop.f32.mrf.mxu0
    %440 = vmatprep.mubr.f32.mxu0 0.0
    %441 = vmatmul.mubr.f32.gmra.mxu0 %v96
    %v442 = vpop.f32.mrf.mxu0
    %v443 = vadd.f32 0.0, %v442
    %v444 = vpop.f32.mrf.mxu0
    %445 = vmatprep.mubr.f32.mxu0 0.0
    %446 = vmatmul.mubr.f32.gmra.mxu0 %v97
    %v447 = vpop.f32.mrf.mxu0
    %v448 = vadd.f32 0.0, %v447
    %v449 = vpop.f32.mrf.mxu0
    %450 = vmatprep.mubr.f32.mxu0 0.0
    %451 = vmatmul.mubr.f32.gmra.mxu0 %v98
    %v452 = vpop.f32.mrf.mxu0
    %v453 = vadd.f32 0.0, %v452
    %v454 = vpop.f32.mrf.mxu0
    %455 = vmatprep.mubr.f32.mxu0 0.0
    %456 = vmatmul.mubr.f32.gmra.mxu0 %v99
    %v457 = vpop.f32.mrf.mxu0
    %v458 = vadd.f32 0.0, %v457
    %v459 = vpop.f32.mrf.mxu0
    %460 = vmatprep.mubr.f32.mxu0 0.0
    %461 = vmatmul.mubr.f32.gmra.mxu0 %v100
    %v462 = vpop.f32.mrf.mxu0
    %v463 = vadd.f32 0.0, %v462
    %v464 = vpop.f32.mrf.mxu0
    %465 = vmatprep.mubr.f32.mxu0 0.0
    %466 = vmatmul.mubr.f32.gmra.mxu0 %v101
    %v467 = vpop.f32.mrf.mxu0
    %v468 = vadd.f32 0.0, %v467
    %v469 = vpop.f32.mrf.mxu0
    %470 = vmatprep.mubr.f32.mxu0 0.0
    %471 = vmatmul.mubr.f32.gmra.mxu0 %v102
    %v472 = vpop.f32.mrf.mxu0
    %v473 = vadd.f32 0.0, %v472
    %v474 = vpop.f32.mrf.mxu0
    %475 = vmatprep.mubr.f32.mxu0 0.0
    %476 = vmatmul.mubr.f32.gmra.mxu0 %v103
    %v477 = vpop.f32.mrf.mxu0
    %v478 = vadd.f32 0.0, %v477
    %v479 = vpop.f32.mrf.mxu0
    %480 = vmatprep.mubr.f32.mxu0 0.0
    %481 = vmatmul.mubr.f32.gmra.mxu0 %v104
    %v482 = vpop.f32.mrf.mxu0
    %v483 = vadd.f32 0.0, %v482
    %v484 = vpop.f32.mrf.mxu0
    %485 = vmatprep.mubr.f32.mxu0 0.0
    %486 = vmatmul.mubr.f32.gmra.mxu0 %v105
    %v487 = vpop.f32.mrf.mxu0
    %v488 = vadd.f32 0.0, %v487
    %v489 = vpop.f32.mrf.mxu0
    %490 = vmatprep.mubr.f32.mxu0 0.0
    %491 = vmatmul.mubr.f32.gmra.mxu0 %v106
    %v492 = vpop.f32.mrf.mxu0
    %v493 = vadd.f32 0.0, %v492
    %v494 = vpop.f32.mrf.mxu0
    %495 = vmatprep.mubr.f32.mxu0 0.0
    %496 = vmatmul.mubr.f32.gmra.mxu0 %v107
    %v497 = vpop.f32.mrf.mxu0
    %v498 = vadd.f32 0.0, %v497
    %v499 = vpop.f32.mrf.mxu0
    %500 = vmatprep.mubr.f32.mxu0 0.0
    %501 = vmatmul.mubr.f32.gmra.mxu0 %v108
    %v502 = vpop.f32.mrf.mxu0
    %v503 = vadd.f32 0.0, %v502
    %v504 = vpop.f32.mrf.mxu0
    %505 = vmatprep.mubr.f32.mxu0 0.0
    %506 = vmatmul.mubr.f32.gmra.mxu0 %v109
    %v507 = vpop.f32.mrf.mxu0
    %v508 = vadd.f32 0.0, %v507
    %v509 = vpop.f32.mrf.mxu0
    %510 = vdwg.mxu0
    %v511 = vld [vmem:[%s2] sm:$0x1]
    %v513 = vlaneseq
    %v514 = vshrl.u32 %v513, 7
    %v515 = vsub.s32 0, %v514
    %v516 = vrot.slane %v511, %v515
    %v518 = vmul.f32 %v193, %v516
    %v519 = vmul.f32 %v198, %v516
    %v520 = vmul.f32 %v203, %v516
    %v521 = vmul.f32 %v208, %v516
    %v522 = vmul.f32 %v213, %v516
    %v523 = vmul.f32 %v218, %v516
    %v524 = vmul.f32 %v223, %v516
    %v525 = vmul.f32 %v228, %v516
    %v526 = vmul.f32 %v233, %v516
    %v527 = vmul.f32 %v238, %v516
    %v528 = vmul.f32 %v243, %v516
    %v529 = vmul.f32 %v248, %v516
    %v530 = vmul.f32 %v253, %v516
    %v531 = vmul.f32 %v258, %v516
    %v532 = vmul.f32 %v263, %v516
    %v533 = vmul.f32 %v268, %v516
    %v534 = vmul.f32 %v273, %v516
    %v535 = vmul.f32 %v278, %v516
    %v536 = vmul.f32 %v283, %v516
    %v537 = vmul.f32 %v288, %v516
    %v538 = vmul.f32 %v293, %v516
    %v539 = vmul.f32 %v298, %v516
    %v540 = vmul.f32 %v303, %v516
    %v541 = vmul.f32 %v308, %v516
    %v542 = vmul.f32 %v313, %v516
    %v543 = vmul.f32 %v318, %v516
    %v544 = vmul.f32 %v323, %v516
    %v545 = vmul.f32 %v328, %v516
    %v546 = vmul.f32 %v333, %v516
    %v547 = vmul.f32 %v338, %v516
    %v548 = vmul.f32 %v343, %v516
    %v549 = vmul.f32 %v348, %v516
    %v550 = vmul.f32 %v353, %v516
    %v551 = vmul.f32 %v358, %v516
    %v552 = vmul.f32 %v363, %v516
    %v553 = vmul.f32 %v368, %v516
    %v554 = vmul.f32 %v373, %v516
    %v555 = vmul.f32 %v378, %v516
    %v556 = vmul.f32 %v383, %v516
    %v557 = vmul.f32 %v388, %v516
    %v558 = vmul.f32 %v393, %v516
    %v559 = vmul.f32 %v398, %v516
    %v560 = vmul.f32 %v403, %v516
    %v561 = vmul.f32 %v408, %v516
    %v562 = vmul.f32 %v413, %v516
    %v563 = vmul.f32 %v418, %v516
    %v564 = vmul.f32 %v423, %v516
    %v565 = vmul.f32 %v428, %v516
    %v566 = vmul.f32 %v433, %v516
    %v567 = vmul.f32 %v438, %v516
    %v568 = vmul.f32 %v443, %v516
    %v569 = vmul.f32 %v448, %v516
    %v570 = vmul.f32 %v453, %v516
    %v571 = vmul.f32 %v458, %v516
    %v572 = vmul.f32 %v463, %v516
    %v573 = vmul.f32 %v468, %v516
    %v574 = vmul.f32 %v473, %v516
    %v575 = vmul.f32 %v478, %v516
    %v576 = vmul.f32 %v483, %v516
    %v577 = vmul.f32 %v488, %v516
    %v578 = vmul.f32 %v493, %v516
    %v579 = vmul.f32 %v498, %v516
    %v580 = vmul.f32 %v503, %v516
    %v581 = vmul.f32 %v508, %v516
    %v582 = vld [vmem:[%s3] sm:$0x1]
    %v584 = vlaneseq
    %v585 = vshrl.u32 %v584, 7
    %v586 = vsub.s32 0, %v585
    %v587 = vrot.slane %v582, %v586
    %v589 = vadd.f32 %v518, %v587
    %v590 = vadd.f32 %v519, %v587
    %v591 = vadd.f32 %v520, %v587
    %v592 = vadd.f32 %v521, %v587
    %v593 = vadd.f32 %v522, %v587
    %v594 = vadd.f32 %v523, %v587
    %v595 = vadd.f32 %v524, %v587
    %v596 = vadd.f32 %v525, %v587
    %v597 = vadd.f32 %v526, %v587
    %v598 = vadd.f32 %v527, %v587
    %v599 = vadd.f32 %v528, %v587
    %v600 = vadd.f32 %v529, %v587
    %v601 = vadd.f32 %v530, %v587
    %v602 = vadd.f32 %v531, %v587
    %v603 = vadd.f32 %v532, %v587
    %v604 = vadd.f32 %v533, %v587
    %v605 = vadd.f32 %v534, %v587
    %v606 = vadd.f32 %v535, %v587
    %v607 = vadd.f32 %v536, %v587
    %v608 = vadd.f32 %v537, %v587
    %v609 = vadd.f32 %v538, %v587
    %v610 = vadd.f32 %v539, %v587
    %v611 = vadd.f32 %v540, %v587
    %v612 = vadd.f32 %v541, %v587
    %v613 = vadd.f32 %v542, %v587
    %v614 = vadd.f32 %v543, %v587
    %v615 = vadd.f32 %v544, %v587
    %v616 = vadd.f32 %v545, %v587
    %v617 = vadd.f32 %v546, %v587
    %v618 = vadd.f32 %v547, %v587
    %v619 = vadd.f32 %v548, %v587
    %v620 = vadd.f32 %v549, %v587
    %v621 = vadd.f32 %v550, %v587
    %v622 = vadd.f32 %v551, %v587
    %v623 = vadd.f32 %v552, %v587
    %v624 = vadd.f32 %v553, %v587
    %v625 = vadd.f32 %v554, %v587
    %v626 = vadd.f32 %v555, %v587
    %v627 = vadd.f32 %v556, %v587
    %v628 = vadd.f32 %v557, %v587
    %v629 = vadd.f32 %v558, %v587
    %v630 = vadd.f32 %v559, %v587
    %v631 = vadd.f32 %v560, %v587
    %v632 = vadd.f32 %v561, %v587
    %v633 = vadd.f32 %v562, %v587
    %v634 = vadd.f32 %v563, %v587
    %v635 = vadd.f32 %v564, %v587
    %v636 = vadd.f32 %v565, %v587
    %v637 = vadd.f32 %v566, %v587
    %v638 = vadd.f32 %v567, %v587
    %v639 = vadd.f32 %v568, %v587
    %v640 = vadd.f32 %v569, %v587
    %v641 = vadd.f32 %v570, %v587
    %v642 = vadd.f32 %v571, %v587
    %v643 = vadd.f32 %v572, %v587
    %v644 = vadd.f32 %v573, %v587
    %v645 = vadd.f32 %v574, %v587
    %v646 = vadd.f32 %v575, %v587
    %v647 = vadd.f32 %v576, %v587
    %v648 = vadd.f32 %v577, %v587
    %v649 = vadd.f32 %v578, %v587
    %v650 = vadd.f32 %v579, %v587
    %v651 = vadd.f32 %v580, %v587
    %v652 = vadd.f32 %v581, %v587
    %v653 = vmax.f32 %v589, 0.0
    %v654 = vmax.f32 %v590, 0.0
    %v655 = vmax.f32 %v591, 0.0
    %v656 = vmax.f32 %v592, 0.0
    %v657 = vmax.f32 %v593, 0.0
    %v658 = vmax.f32 %v594, 0.0
    %v659 = vmax.f32 %v595, 0.0
    %v660 = vmax.f32 %v596, 0.0
    %v661 = vmax.f32 %v597, 0.0
    %v662 = vmax.f32 %v598, 0.0
    %v663 = vmax.f32 %v599, 0.0
    %v664 = vmax.f32 %v600, 0.0
    %v665 = vmax.f32 %v601, 0.0
    %v666 = vmax.f32 %v602, 0.0
    %v667 = vmax.f32 %v603, 0.0
    %v668 = vmax.f32 %v604, 0.0
    %v669 = vmax.f32 %v605, 0.0
    %v670 = vmax.f32 %v606, 0.0
    %v671 = vmax.f32 %v607, 0.0
    %v672 = vmax.f32 %v608, 0.0
    %v673 = vmax.f32 %v609, 0.0
    %v674 = vmax.f32 %v610, 0.0
    %v675 = vmax.f32 %v611, 0.0
    %v676 = vmax.f32 %v612, 0.0
    %v677 = vmax.f32 %v613, 0.0
    %v678 = vmax.f32 %v614, 0.0
    %v679 = vmax.f32 %v615, 0.0
    %v680 = vmax.f32 %v616, 0.0
    %v681 = vmax.f32 %v617, 0.0
    %v682 = vmax.f32 %v618, 0.0
    %v683 = vmax.f32 %v619, 0.0
    %v684 = vmax.f32 %v620, 0.0
    %v685 = vmax.f32 %v621, 0.0
    %v686 = vmax.f32 %v622, 0.0
    %v687 = vmax.f32 %v623, 0.0
    %v688 = vmax.f32 %v624, 0.0
    %v689 = vmax.f32 %v625, 0.0
    %v690 = vmax.f32 %v626, 0.0
    %v691 = vmax.f32 %v627, 0.0
    %v692 = vmax.f32 %v628, 0.0
    %v693 = vmax.f32 %v629, 0.0
    %v694 = vmax.f32 %v630, 0.0
    %v695 = vmax.f32 %v631, 0.0
    %v696 = vmax.f32 %v632, 0.0
    %v697 = vmax.f32 %v633, 0.0
    %v698 = vmax.f32 %v634, 0.0
    %v699 = vmax.f32 %v635, 0.0
    %v700 = vmax.f32 %v636, 0.0
    %v701 = vmax.f32 %v637, 0.0
    %v702 = vmax.f32 %v638, 0.0
    %v703 = vmax.f32 %v639, 0.0
    %v704 = vmax.f32 %v640, 0.0
    %v705 = vmax.f32 %v641, 0.0
    %v706 = vmax.f32 %v642, 0.0
    %v707 = vmax.f32 %v643, 0.0
    %v708 = vmax.f32 %v644, 0.0
    %v709 = vmax.f32 %v645, 0.0
    %v710 = vmax.f32 %v646, 0.0
    %v711 = vmax.f32 %v647, 0.0
    %v712 = vmax.f32 %v648, 0.0
    %v713 = vmax.f32 %v649, 0.0
    %v714 = vmax.f32 %v650, 0.0
    %v715 = vmax.f32 %v651, 0.0
    %v716 = vmax.f32 %v652, 0.0
    %717 = vst [vmem:[#allocation7] sm:$0xff] %v653
    %718 = vst [vmem:[#allocation7 + $0x8] sm:$0xff] %v654
    %719 = vst [vmem:[#allocation7 + $0x10] sm:$0xff] %v655
    %720 = vst [vmem:[#allocation7 + $0x18] sm:$0xff] %v656
    %721 = vst [vmem:[#allocation7 + $0x20] sm:$0xff] %v657
    %722 = vst [vmem:[#allocation7 + $0x28] sm:$0xff] %v658
    %723 = vst [vmem:[#allocation7 + $0x30] sm:$0xff] %v659
    %724 = vst [vmem:[#allocation7 + $0x38] sm:$0xff] %v660
    %725 = vst [vmem:[#allocation7 + $0x40] sm:$0xff] %v661
    %726 = vst [vmem:[#allocation7 + $0x48] sm:$0xff] %v662
    %727 = vst [vmem:[#allocation7 + $0x50] sm:$0xff] %v663
    %728 = vst [vmem:[#allocation7 + $0x58] sm:$0xff] %v664
    %729 = vst [vmem:[#allocation7 + $0x60] sm:$0xff] %v665
    %730 = vst [vmem:[#allocation7 + $0x68] sm:$0xff] %v666
    %731 = vst [vmem:[#allocation7 + $0x70] sm:$0xff] %v667
    %732 = vst [vmem:[#allocation7 + $0x78] sm:$0xff] %v668
    %733 = vst [vmem:[#allocation7 + $0x80] sm:$0xff] %v669
    %734 = vst [vmem:[#allocation7 + $0x88] sm:$0xff] %v670
    %735 = vst [vmem:[#allocation7 + $0x90] sm:$0xff] %v671
    %736 = vst [vmem:[#allocation7 + $0x98] sm:$0xff] %v672
    %737 = vst [vmem:[#allocation7 + $0xa0] sm:$0xff] %v673
    %738 = vst [vmem:[#allocation7 + $0xa8] sm:$0xff] %v674
    %739 = vst [vmem:[#allocation7 + $0xb0] sm:$0xff] %v675
    %740 = vst [vmem:[#allocation7 + $0xb8] sm:$0xff] %v676
    %741 = vst [vmem:[#allocation7 + $0xc0] sm:$0xff] %v677
    %742 = vst [vmem:[#allocation7 + $0xc8] sm:$0xff] %v678
    %743 = vst [vmem:[#allocation7 + $0xd0] sm:$0xff] %v679
    %744 = vst [vmem:[#allocation7 + $0xd8] sm:$0xff] %v680
    %745 = vst [vmem:[#allocation7 + $0xe0] sm:$0xff] %v681
    %746 = vst [vmem:[#allocation7 + $0xe8] sm:$0xff] %v682
    %747 = vst [vmem:[#allocation7 + $0xf0] sm:$0xff] %v683
    %748 = vst [vmem:[#allocation7 + $0xf8] sm:$0xff] %v684
    %749 = vst [vmem:[#allocation7 + $0x100] sm:$0xff] %v685
    %750 = vst [vmem:[#allocation7 + $0x108] sm:$0xff] %v686
    %751 = vst [vmem:[#allocation7 + $0x110] sm:$0xff] %v687
    %752 = vst [vmem:[#allocation7 + $0x118] sm:$0xff] %v688
    %753 = vst [vmem:[#allocation7 + $0x120] sm:$0xff] %v689
    %754 = vst [vmem:[#allocation7 + $0x128] sm:$0xff] %v690
    %755 = vst [vmem:[#allocation7 + $0x130] sm:$0xff] %v691
    %756 = vst [vmem:[#allocation7 + $0x138] sm:$0xff] %v692
    %757 = vst [vmem:[#allocation7 + $0x140] sm:$0xff] %v693
    %758 = vst [vmem:[#allocation7 + $0x148] sm:$0xff] %v694
    %759 = vst [vmem:[#allocation7 + $0x150] sm:$0xff] %v695
    %760 = vst [vmem:[#allocation7 + $0x158] sm:$0xff] %v696
    %761 = vst [vmem:[#allocation7 + $0x160] sm:$0xff] %v697
    %762 = vst [vmem:[#allocation7 + $0x168] sm:$0xff] %v698
    %763 = vst [vmem:[#allocation7 + $0x170] sm:$0xff] %v699
    %764 = vst [vmem:[#allocation7 + $0x178] sm:$0xff] %v700
    %765 = vst [vmem:[#allocation7 + $0x180] sm:$0xff] %v701
    %766 = vst [vmem:[#allocation7 + $0x188] sm:$0xff] %v702
    %767 = vst [vmem:[#allocation7 + $0x190] sm:$0xff] %v703
    %768 = vst [vmem:[#allocation7 + $0x198] sm:$0xff] %v704
    %769 = vst [vmem:[#allocation7 + $0x1a0] sm:$0xff] %v705
    %770 = vst [vmem:[#allocation7 + $0x1a8] sm:$0xff] %v706
    %771 = vst [vmem:[#allocation7 + $0x1b0] sm:$0xff] %v707
    %772 = vst [vmem:[#allocation7 + $0x1b8] sm:$0xff] %v708
    %773 = vst [vmem:[#allocation7 + $0x1c0] sm:$0xff] %v709
    %774 = vst [vmem:[#allocation7 + $0x1c8] sm:$0xff] %v710
    %775 = vst [vmem:[#allocation7 + $0x1d0] sm:$0xff] %v711
    %776 = vst [vmem:[#allocation7 + $0x1d8] sm:$0xff] %v712
    %777 = vst [vmem:[#allocation7 + $0x1e0] sm:$0xff] %v713
    %778 = vst [vmem:[#allocation7 + $0x1e8] sm:$0xff] %v714
    %779 = vst [vmem:[#allocation7 + $0x1f0] sm:$0xff] %v715
    %780 = vst [vmem:[#allocation7 + $0x1f8] sm:$0xff] %v716
    // Predicated region
    $region26: #{tpu_custom_call.1} parent=1 // pred_check
      _
    $region27: #{tpu_custom_call.1} parent=1 // pred_check_branch
      %782 = sbr.rel (0) target = $region29
    $region28: #{tpu_custom_call.1} parent=1 // pred_region
      %s784 = ssub.s32 8192, 8192
      %785 = vsyncadd [#allocation4], %s784
      %s786 = sshll.u32 [#allocation7], 4
      %s787 = int_to_ptr.vmem [resolvable:$true] %s786
      %792 = dma.vmem_to_hbm [thread:$0]  %s787, 8192, %s4, [#allocation4], 128, 128, 8
    $region29: #{tpu_custom_call.1} parent=1 // pred_fallthru
      _
    // Predicated region
    $region30: #{tpu_custom_call.1} parent=1 // pred_check
      _
    $region31: #{tpu_custom_call.1} parent=1 // pred_check_branch
      %794 = sbr.rel (0) target = $region33
    $region32: #{tpu_custom_call.1} parent=1 // pred_region
      %795 = dma.done [#allocation4], 8192
    $region33: #{tpu_custom_call.1} parent=1 // pred_fallthru
      _
    %796 = vsyncpa [#allocation3], 1
    %797 = vsyncpa [#allocation6], 1
    %798 = vsyncpa [#allocation4], 1

</llo_original>
